<compile_context>
chip_gen: v5e
topology: v5e:2x2
jax: 0.10.0
libtpu: 0.0.40
codegen_flags: <defaults>
</compile_context>

<pallas_src>
import numpy as np
import jax
import jax.numpy as jnp
from jax import lax
from jax.experimental import pallas as pl
from jax.experimental.pallas import tpu as pltpu  # noqa: F401  (not needed at this size)

# ----------------------------- config ---------------------------------------
B = 2                            # batch
T = 8                            # block_size == sequence length
E = 32                           # embedding_size
NUM_HEADS = 4
HEAD = E // NUM_HEADS            # 8
HIDDEN = 4 * E                   # encoder FFN hidden (128)
MASKED = True
SLOPE = 2.0 ** (-8.0 / NUM_HEADS)  # base ALiBi slope; head i uses SLOPE**(i+1)
EPS = 1e-5
N = B * T                        # packed sequence length (rows fed to the MXU)

# weight-slab column offsets (each matrix starts at a 128-lane boundary)
WQKV_COL = 0                     # (E, 3E)  = (32, 96)
WO_COL = 128                     # (E, E)   = (32, 32)
W1_COL = 256                     # (E, 4E)  = (32, 128)
W2T_COL = 384                    # (E, 4E)  = (32, 128)   (w2 transposed)
SLAB_W = 512

# contracting-last-dims dot (no transposes materialized)
_DN_LAST = (((1,), (1,)), ((), ()))


# ----------------------------- kernel ---------------------------------------
def block_kernel(x_ref, w_ref, vec_ref, bias_ref, y_ref, attn_ref):
    x = x_ref[...]                                   # (N, E) = (16, 32)

    # packed per-channel vectors (single (8,128) VMEM tile)
    bo = vec_ref[0:1, :E]
    g1 = vec_ref[1:2, :E]
    be1 = vec_ref[2:3, :E]
    g2 = vec_ref[3:4, :E]
    be2 = vec_ref[4:5, :E]
    bb1 = vec_ref[5:6, :HIDDEN]
    bb2 = vec_ref[6:7, :E]

    # ---- LayerNorm 1 (PyTorch semantics: biased var, eps inside sqrt) ----
    mean1 = jnp.mean(x, axis=-1, keepdims=True)
    var1 = jnp.mean((x - mean1) ** 2, axis=-1, keepdims=True)
    ln1 = (x - mean1) * lax.rsqrt(var1 + EPS) * g1 + be1

    # ---- fused QKV projection: one lane-dense MXU push (16,32)x(32,96) ----
    qkv = jnp.dot(ln1, w_ref[:, WQKV_COL:WQKV_COL + 3 * E],
                  preferred_element_type=jnp.float32)            # (N, 3E)

    wo = w_ref[:, WO_COL:WO_COL + E]                 # (E, E)
    scale = float(HEAD) ** (-0.5)
    attn_out = jnp.zeros((N, E), jnp.float32)

    for h in range(NUM_HEADS):                       # static unrolled (4 iterations)
        q_h = qkv[:, h * HEAD:(h + 1) * HEAD]                    # (N, HEAD)
        k_h = qkv[:, E + h * HEAD:E + (h + 1) * HEAD]            # (N, HEAD)
        v_h = qkv[:, 2 * E + h * HEAD:2 * E + (h + 1) * HEAD]    # (N, HEAD)

        # q_h . k_h contracting last dims -> (N, N); no k^T materialized
        s = lax.dot_general(q_h, k_h, dimension_numbers=_DN_LAST,
                            preferred_element_type=jnp.float32) * scale
        # precomputed, slope-scaled ALiBi + causal + batch-block bias
        s = s + bias_ref[h]

        # row-wise softmax (cross-batch entries are -inf -> exactly 0)
        s = s - jnp.max(s, axis=-1, keepdims=True)
        e = jnp.exp(s)
        p = e * pl.reciprocal(jnp.sum(e, axis=-1, keepdims=True), approx=False)

        attn_ref[h, :, :] = p                        # full block-diag map for head h

        pv = jnp.dot(p, v_h, preferred_element_type=jnp.float32)             # (N, HEAD)
        # accumulate the output projection directly (replaces concat + big matmul)
        attn_out = attn_out + jnp.dot(pv, wo[h * HEAD:(h + 1) * HEAD, :],
                                      preferred_element_type=jnp.float32)

    attn_out = attn_out + bo

    # ---- residual 1 ----
    x1 = x + attn_out

    # ---- LayerNorm 2 ----
    mean2 = jnp.mean(x1, axis=-1, keepdims=True)
    var2 = jnp.mean((x1 - mean2) ** 2, axis=-1, keepdims=True)
    ln2 = (x1 - mean2) * lax.rsqrt(var2 + EPS) * g2 + be2

    # ---- FeedForward: Linear -> ReLU -> Linear (dropout = identity) ----
    hdn = jnp.maximum(
        jnp.dot(ln2, w_ref[:, W1_COL:W1_COL + HIDDEN],
                preferred_element_type=jnp.float32) + bb1, 0.0)              # (N, 4E)
    # second FFN matmul against the pre-transposed, lane-dense w2^T slab
    ff = lax.dot_general(hdn, w_ref[:, W2T_COL:W2T_COL + HIDDEN],
                         dimension_numbers=_DN_LAST,
                         preferred_element_type=jnp.float32) + bb2           # (N, E)

    # ---- residual 2 (single consolidated store) ----
    y_ref[...] = x1 + ff


# ----------------------- host-side, once-per-model packing -------------------
def _build_alibi_bias():
    """Slope-scaled ALiBi + causal + batch-block bias, (NUM_HEADS, N, N), numpy."""
    r = np.arange(N)[:, None]
    c = np.arange(N)[None, :]
    same_batch = (r // T) == (c // T)
    pr, pc = r % T, c % T
    delta = (pc - pr).astype(np.float32)             # j - i within a batch block
    bias = np.empty((NUM_HEADS, N, N), np.float32)
    for h in range(NUM_HEADS):
        slope_h = float(SLOPE ** (h + 1))
        if MASKED:
            allowed = same_batch & (pc <= pr)        # causal + same batch
            bias[h] = np.where(allowed, delta * slope_h, -np.inf)
        else:
            bias[h] = np.where(same_batch, -np.abs(delta) * slope_h, -np.inf)
    return bias


def pack_params(params):
    """Pack all parameters into two lane-dense slabs + the constant bias.

    Called ONCE at parameter-load time (NOT inside the jitted per-call path).
    """
    (wq, wk, wv, wo, bo, g1, be1, g2, be2, w1, bb1, w2, bb2) = \
        [np.asarray(p, np.float32) for p in params]

    # fuse per-head projections: columns [h*HEAD:(h+1)*HEAD] of each E block = head h
    wq_c = np.transpose(wq, (1, 0, 2)).reshape(E, E)
    wk_c = np.transpose(wk, (1, 0, 2)).reshape(E, E)
    wv_c = np.transpose(wv, (1, 0, 2)).reshape(E, E)

    w_slab = np.zeros((E, SLAB_W), np.float32)
    w_slab[:, WQKV_COL:WQKV_COL + 3 * E] = np.concatenate([wq_c, wk_c, wv_c], axis=1)
    w_slab[:, WO_COL:WO_COL + E] = wo
    w_slab[:, W1_COL:W1_COL + HIDDEN] = w1
    w_slab[:, W2T_COL:W2T_COL + HIDDEN] = w2.T       # lane-dense (E, HIDDEN)

    vec_slab = np.zeros((8, 128), np.float32)
    vec_slab[0, :E] = bo[0]
    vec_slab[1, :E] = g1[0]
    vec_slab[2, :E] = be1[0]
    vec_slab[3, :E] = g2[0]
    vec_slab[4, :E] = be2[0]
    vec_slab[5, :HIDDEN] = bb1[0]
    vec_slab[6, :E] = bb2[0]

    bias = _build_alibi_bias()
    return (jnp.asarray(w_slab), jnp.asarray(vec_slab), jnp.asarray(bias))


# ----------------------------- wrapper ---------------------------------------
@jax.jit
def block_forward(x, packed):
    w_slab, vec_slab, bias = packed

    # Pack batches along the row (sequence) axis: (B, T, E) -> (B*T, E).
    x2 = x.reshape(N, E)

    # Single invocation, no grid: every operand lives fully in VMEM (< 100 KiB).
    y_flat, attn_full = pl.pallas_call(
        block_kernel,
        out_shape=(jax.ShapeDtypeStruct((N, E), jnp.float32),
                   jax.ShapeDtypeStruct((NUM_HEADS, N, N), jnp.float32)),
    )(x2, w_slab, vec_slab, bias)

    y = y_flat.reshape(B, T, E)
    # Extract the per-batch diagonal (T, T) blocks -> (NUM_HEADS, B, T, T).
    attn = jnp.stack(
        [attn_full[:, b * T:(b + 1) * T, b * T:(b + 1) * T] for b in range(B)],
        axis=1)
    return y, attn


# ----------------------------- pure-JAX reference ----------------------------
def block_reference(x, params):
    (wq, wk, wv, wo, bo, g1, be1, g2, be2, w1, bb1, w2, bb2) = params

    def ln(v, g, b):
        m = jnp.mean(v, axis=-1, keepdims=True)
        s = jnp.mean((v - m) ** 2, axis=-1, keepdims=True)
        return (v - m) / jnp.sqrt(s + EPS) * g + b

    ln1 = ln(x, g1[0], be1[0])
    i = jnp.arange(T, dtype=jnp.float32)[:, None]
    j = jnp.arange(T, dtype=jnp.float32)[None, :]

    heads, maps = [], []
    for h in range(NUM_HEADS):
        q = ln1 @ wq[h]; k = ln1 @ wk[h]; v = ln1 @ wv[h]
        s = jnp.einsum("btd,bsd->bts", q, k) * (HEAD ** -0.5)
        slope_h = SLOPE ** (h + 1)
        if MASKED:
            bias = jnp.where(j <= i, (j - i) * slope_h, -jnp.inf)
        else:
            bias = -jnp.abs(j - i) * slope_h
        s = s + bias[None]
        p = jax.nn.softmax(s, axis=-1)
        maps.append(p)
        heads.append(jnp.einsum("bts,bsd->btd", p, v))
    cat = jnp.concatenate(heads, axis=-1)
    x1 = x + cat @ wo + bo[0]
    ln2 = ln(x1, g2[0], be2[0])
    ff = jnp.maximum(ln2 @ w1 + bb1[0], 0.0) @ w2 + bb2[0]
    return x1 + ff, jnp.stack(maps, axis=0)


# ----------------------------- main ------------------------------------------
if __name__ == "__main__":
    key = jax.random.PRNGKey(0)
    ks = jax.random.split(key, 16)

    x = jax.random.normal(ks[0], (B, T, E), dtype=jnp.float32)

    wq = 0.1 * jax.random.normal(ks[1], (NUM_HEADS, E, HEAD), dtype=jnp.float32)
    wk = 0.1 * jax.random.normal(ks[2], (NUM_HEADS, E, HEAD), dtype=jnp.float32)
    wv = 0.1 * jax.random.normal(ks[3], (NUM_HEADS, E, HEAD), dtype=jnp.float32)
    wo = 0.1 * jax.random.normal(ks[4], (E, E), dtype=jnp.float32)
    bo = 0.1 * jax.random.normal(ks[5], (1, E), dtype=jnp.float32)

    g1 = 1.0 + 0.05 * jax.random.normal(ks[6], (1, E), dtype=jnp.float32)
    be1 = 0.05 * jax.random.normal(ks[7], (1, E), dtype=jnp.float32)
    g2 = 1.0 + 0.05 * jax.random.normal(ks[8], (1, E), dtype=jnp.float32)
    be2 = 0.05 * jax.random.normal(ks[9], (1, E), dtype=jnp.float32)

    w1 = 0.1 * jax.random.normal(ks[10], (E, HIDDEN), dtype=jnp.float32)
    bb1 = 0.1 * jax.random.normal(ks[11], (1, HIDDEN), dtype=jnp.float32)
    w2 = 0.1 * jax.random.normal(ks[12], (HIDDEN, E), dtype=jnp.float32)
    bb2 = 0.1 * jax.random.normal(ks[13], (1, E), dtype=jnp.float32)

    params = (wq, wk, wv, wo, bo, g1, be1, g2, be2, w1, bb1, w2, bb2)

    # One-time, host-side parameter packing (hoisted out of the per-call path).
    packed = pack_params(params)

    y, attn = block_forward(x, packed)
    jax.block_until_ready((y, attn))

    y_ref, attn_ref = block_reference(x, params)
    np.testing.assert_allclose(np.asarray(y), np.asarray(y_ref), rtol=1e-4, atol=1e-4)
    np.testing.assert_allclose(np.asarray(attn), np.asarray(attn_ref), rtol=1e-4, atol=1e-4)

    print("KERNEL_OK")
</pallas_src>

<mosaic_0001>
module attributes {stable_mosaic.version = 11 : i64} {
  func.func @block_kernel(%arg0: memref<16x32xf32, #tpu.memory_space<vmem>>, %arg1: memref<32x512xf32, #tpu.memory_space<vmem>>, %arg2: memref<8x128xf32, #tpu.memory_space<vmem>>, %arg3: memref<4x16x16xf32, #tpu.memory_space<vmem>>, %arg4: memref<16x32xf32, #tpu.memory_space<vmem>>, %arg5: memref<4x16x16xf32, #tpu.memory_space<vmem>>) attributes {dimension_semantics = [], scalar_prefetch = 0 : i64, scratch_operands = 0 : i64, tpu.core_type = #tpu.core_type<tc>} {
    %c0 = arith.constant 0 : index
    %c0_0 = arith.constant 0 : index
    %0 = vector.load %arg0[%c0, %c0_0] : memref<16x32xf32, #tpu.memory_space<vmem>>, vector<16x32xf32>
    %c0_1 = arith.constant 0 : index
    %c0_2 = arith.constant 0 : index
    %1 = vector.load %arg2[%c0_1, %c0_2] : memref<8x128xf32, #tpu.memory_space<vmem>>, vector<1x32xf32>
    %c1 = arith.constant 1 : index
    %c0_3 = arith.constant 0 : index
    %2 = vector.load %arg2[%c1, %c0_3] : memref<8x128xf32, #tpu.memory_space<vmem>>, vector<1x32xf32>
    %c2 = arith.constant 2 : index
    %c0_4 = arith.constant 0 : index
    %3 = vector.load %arg2[%c2, %c0_4] : memref<8x128xf32, #tpu.memory_space<vmem>>, vector<1x32xf32>
    %c3 = arith.constant 3 : index
    %c0_5 = arith.constant 0 : index
    %4 = vector.load %arg2[%c3, %c0_5] : memref<8x128xf32, #tpu.memory_space<vmem>>, vector<1x32xf32>
    %c4 = arith.constant 4 : index
    %c0_6 = arith.constant 0 : index
    %5 = vector.load %arg2[%c4, %c0_6] : memref<8x128xf32, #tpu.memory_space<vmem>>, vector<1x32xf32>
    %c5 = arith.constant 5 : index
    %c0_7 = arith.constant 0 : index
    %6 = vector.load %arg2[%c5, %c0_7] : memref<8x128xf32, #tpu.memory_space<vmem>>, vector<1x128xf32>
    %c6 = arith.constant 6 : index
    %c0_8 = arith.constant 0 : index
    %7 = vector.load %arg2[%c6, %c0_8] : memref<8x128xf32, #tpu.memory_space<vmem>>, vector<1x32xf32>
    %cst = arith.constant dense<0.000000e+00> : vector<16xf32>
    %8 = vector.multi_reduction <add>, %0, %cst [1] : vector<16x32xf32> to vector<16xf32>
    %9 = vector.shape_cast %8 : vector<16xf32> to vector<16x1xf32>
    %cst_9 = arith.constant 3.200000e+01 : f32
    %10 = vector.broadcast %cst_9 : f32 to vector<16x1xf32>
    %11 = arith.divf %9, %10 : vector<16x1xf32>
    %12 = vector.broadcast %11 : vector<16x1xf32> to vector<16x32xf32>
    %13 = arith.subf %0, %12 : vector<16x32xf32>
    %14 = arith.mulf %13, %13 : vector<16x32xf32>
    %cst_10 = arith.constant dense<0.000000e+00> : vector<16xf32>
    %15 = vector.multi_reduction <add>, %14, %cst_10 [1] : vector<16x32xf32> to vector<16xf32>
    %16 = vector.shape_cast %15 : vector<16xf32> to vector<16x1xf32>
    %cst_11 = arith.constant 3.200000e+01 : f32
    %17 = vector.broadcast %cst_11 : f32 to vector<16x1xf32>
    %18 = arith.divf %16, %17 : vector<16x1xf32>
    %19 = vector.broadcast %11 : vector<16x1xf32> to vector<16x32xf32>
    %20 = arith.subf %0, %19 : vector<16x32xf32>
    %cst_12 = arith.constant 9.99999974E-6 : f32
    %21 = vector.broadcast %cst_12 : f32 to vector<16x1xf32>
    %22 = arith.addf %18, %21 : vector<16x1xf32>
    %23 = math.rsqrt %22 : vector<16x1xf32>
    %24 = vector.broadcast %23 : vector<16x1xf32> to vector<16x32xf32>
    %25 = arith.mulf %20, %24 : vector<16x32xf32>
    %26 = vector.broadcast %2 : vector<1x32xf32> to vector<16x32xf32>
    %27 = arith.mulf %25, %26 : vector<16x32xf32>
    %28 = vector.broadcast %3 : vector<1x32xf32> to vector<16x32xf32>
    %29 = arith.addf %27, %28 : vector<16x32xf32>
    %c0_13 = arith.constant 0 : index
    %c0_14 = arith.constant 0 : index
    %30 = vector.load %arg1[%c0_13, %c0_14] : memref<32x512xf32, #tpu.memory_space<vmem>>, vector<32x96xf32>
    %cst_15 = arith.constant dense<0.000000e+00> : vector<16x96xf32>
    %31 = tpu.matmul %29, %30, %cst_15 {dimension_numbers = #tpu.dot_dimension_numbers<[1], [0], [0], [1], [0, 0, 1, 1], [], []>} : vector<16x32xf32>, vector<32x96xf32>, vector<16x96xf32> -> vector<16x96xf32>
    %c0_16 = arith.constant 0 : index
    %c128 = arith.constant 128 : index
    %32 = vector.load %arg1[%c0_16, %c128] : memref<32x512xf32, #tpu.memory_space<vmem>>, vector<32x32xf32>
    %cst_17 = arith.constant 0.000000e+00 : f32
    %33 = vector.broadcast %cst_17 : f32 to vector<16x32xf32>
    %34 = vector.extract_strided_slice %31 {offsets = [0, 0], sizes = [16, 8], strides = [1, 1]} : vector<16x96xf32> to vector<16x8xf32>
    %35 = vector.extract_strided_slice %31 {offsets = [0, 32], sizes = [16, 8], strides = [1, 1]} : vector<16x96xf32> to vector<16x8xf32>
    %36 = vector.extract_strided_slice %31 {offsets = [0, 64], sizes = [16, 8], strides = [1, 1]} : vector<16x96xf32> to vector<16x8xf32>
    %cst_18 = arith.constant dense<0.000000e+00> : vector<16x16xf32>
    %37 = tpu.matmul %34, %35, %cst_18 {dimension_numbers = #tpu.dot_dimension_numbers<[1], [1], [0], [0], [0, 0, 1, 0], [], []>} : vector<16x8xf32>, vector<16x8xf32>, vector<16x16xf32> -> vector<16x16xf32>
    %cst_19 = arith.constant 0.353553385 : f32
    %38 = vector.broadcast %cst_19 : f32 to vector<16x16xf32>
    %39 = arith.mulf %37, %38 : vector<16x16xf32>
    %c0_20 = arith.constant 0 : index
    %c0_21 = arith.constant 0 : index
    %c0_22 = arith.constant 0 : index
    %40 = vector.load %arg3[%c0_20, %c0_21, %c0_22] : memref<4x16x16xf32, #tpu.memory_space<vmem>>, vector<1x16x16xf32>
    %41 = vector.shape_cast %40 : vector<1x16x16xf32> to vector<16x16xf32>
    %42 = arith.addf %39, %41 : vector<16x16xf32>
    %cst_23 = arith.constant dense<0xFF800000> : vector<16xf32>
    %43 = vector.multi_reduction <maximumf>, %42, %cst_23 [1] : vector<16x16xf32> to vector<16xf32>
    %44 = vector.shape_cast %43 : vector<16xf32> to vector<16x1xf32>
    %45 = vector.broadcast %44 : vector<16x1xf32> to vector<16x16xf32>
    %46 = arith.subf %42, %45 : vector<16x16xf32>
    %47 = math.exp %46 : vector<16x16xf32>
    %cst_24 = arith.constant dense<0.000000e+00> : vector<16xf32>
    %48 = vector.multi_reduction <add>, %47, %cst_24 [1] : vector<16x16xf32> to vector<16xf32>
    %49 = vector.shape_cast %48 : vector<16xf32> to vector<16x1xf32>
    %50 = tpu.reciprocal %49 : vector<16x1xf32> -> vector<16x1xf32>
    %51 = vector.broadcast %50 : vector<16x1xf32> to vector<16x16xf32>
    %52 = arith.mulf %47, %51 : vector<16x16xf32>
    %c0_25 = arith.constant 0 : index
    %c0_26 = arith.constant 0 : index
    %c0_27 = arith.constant 0 : index
    %53 = vector.load %arg5[%c0_25, %c0_26, %c0_27] : memref<4x16x16xf32, #tpu.memory_space<vmem>>, vector<1x16x16xf32>
    %54 = vector.shape_cast %53 : vector<1x16x16xf32> to vector<16x16xf32>
    %55 = vector.shape_cast %52 : vector<16x16xf32> to vector<1x16x16xf32>
    tpu.vector_store %arg5[%c0_25, %c0_26, %c0_27], %55 {strides = array<i32>} : memref<4x16x16xf32, #tpu.memory_space<vmem>>, vector<1x16x16xf32>,
    %cst_28 = arith.constant dense<0.000000e+00> : vector<16x8xf32>
    %56 = tpu.matmul %52, %36, %cst_28 {dimension_numbers = #tpu.dot_dimension_numbers<[1], [0], [0], [1], [0, 0, 1, 1], [], []>} : vector<16x16xf32>, vector<16x8xf32>, vector<16x8xf32> -> vector<16x8xf32>
    %57 = vector.extract_strided_slice %32 {offsets = [0, 0], sizes = [8, 32], strides = [1, 1]} : vector<32x32xf32> to vector<8x32xf32>
    %cst_29 = arith.constant dense<0.000000e+00> : vector<16x32xf32>
    %58 = tpu.matmul %56, %57, %cst_29 {dimension_numbers = #tpu.dot_dimension_numbers<[1], [0], [0], [1], [0, 0, 1, 1], [], []>} : vector<16x8xf32>, vector<8x32xf32>, vector<16x32xf32> -> vector<16x32xf32>
    %59 = arith.addf %33, %58 : vector<16x32xf32>
    %60 = vector.extract_strided_slice %31 {offsets = [0, 8], sizes = [16, 8], strides = [1, 1]} : vector<16x96xf32> to vector<16x8xf32>
    %61 = vector.extract_strided_slice %31 {offsets = [0, 40], sizes = [16, 8], strides = [1, 1]} : vector<16x96xf32> to vector<16x8xf32>
    %62 = vector.extract_strided_slice %31 {offsets = [0, 72], sizes = [16, 8], strides = [1, 1]} : vector<16x96xf32> to vector<16x8xf32>
    %cst_30 = arith.constant dense<0.000000e+00> : vector<16x16xf32>
    %63 = tpu.matmul %60, %61, %cst_30 {dimension_numbers = #tpu.dot_dimension_numbers<[1], [1], [0], [0], [0, 0, 1, 0], [], []>} : vector<16x8xf32>, vector<16x8xf32>, vector<16x16xf32> -> vector<16x16xf32>
    %cst_31 = arith.constant 0.353553385 : f32
    %64 = vector.broadcast %cst_31 : f32 to vector<16x16xf32>
    %65 = arith.mulf %63, %64 : vector<16x16xf32>
    %c1_32 = arith.constant 1 : index
    %c0_33 = arith.constant 0 : index
    %c0_34 = arith.constant 0 : index
    %66 = vector.load %arg3[%c1_32, %c0_33, %c0_34] : memref<4x16x16xf32, #tpu.memory_space<vmem>>, vector<1x16x16xf32>
    %67 = vector.shape_cast %66 : vector<1x16x16xf32> to vector<16x16xf32>
    %68 = arith.addf %65, %67 : vector<16x16xf32>
    %cst_35 = arith.constant dense<0xFF800000> : vector<16xf32>
    %69 = vector.multi_reduction <maximumf>, %68, %cst_35 [1] : vector<16x16xf32> to vector<16xf32>
    %70 = vector.shape_cast %69 : vector<16xf32> to vector<16x1xf32>
    %71 = vector.broadcast %70 : vector<16x1xf32> to vector<16x16xf32>
    %72 = arith.subf %68, %71 : vector<16x16xf32>
    %73 = math.exp %72 : vector<16x16xf32>
    %cst_36 = arith.constant dense<0.000000e+00> : vector<16xf32>
    %74 = vector.multi_reduction <add>, %73, %cst_36 [1] : vector<16x16xf32> to vector<16xf32>
    %75 = vector.shape_cast %74 : vector<16xf32> to vector<16x1xf32>
    %76 = tpu.reciprocal %75 : vector<16x1xf32> -> vector<16x1xf32>
    %77 = vector.broadcast %76 : vector<16x1xf32> to vector<16x16xf32>
    %78 = arith.mulf %73, %77 : vector<16x16xf32>
    %c1_37 = arith.constant 1 : index
    %c0_38 = arith.constant 0 : index
    %c0_39 = arith.constant 0 : index
    %79 = vector.load %arg5[%c1_37, %c0_38, %c0_39] : memref<4x16x16xf32, #tpu.memory_space<vmem>>, vector<1x16x16xf32>
    %80 = vector.shape_cast %79 : vector<1x16x16xf32> to vector<16x16xf32>
    %81 = vector.shape_cast %78 : vector<16x16xf32> to vector<1x16x16xf32>
    tpu.vector_store %arg5[%c1_37, %c0_38, %c0_39], %81 {strides = array<i32>} : memref<4x16x16xf32, #tpu.memory_space<vmem>>, vector<1x16x16xf32>,
    %cst_40 = arith.constant dense<0.000000e+00> : vector<16x8xf32>
    %82 = tpu.matmul %78, %62, %cst_40 {dimension_numbers = #tpu.dot_dimension_numbers<[1], [0], [0], [1], [0, 0, 1, 1], [], []>} : vector<16x16xf32>, vector<16x8xf32>, vector<16x8xf32> -> vector<16x8xf32>
    %83 = vector.extract_strided_slice %32 {offsets = [8, 0], sizes = [8, 32], strides = [1, 1]} : vector<32x32xf32> to vector<8x32xf32>
    %cst_41 = arith.constant dense<0.000000e+00> : vector<16x32xf32>
    %84 = tpu.matmul %82, %83, %cst_41 {dimension_numbers = #tpu.dot_dimension_numbers<[1], [0], [0], [1], [0, 0, 1, 1], [], []>} : vector<16x8xf32>, vector<8x32xf32>, vector<16x32xf32> -> vector<16x32xf32>
    %85 = arith.addf %59, %84 : vector<16x32xf32>
    %86 = vector.extract_strided_slice %31 {offsets = [0, 16], sizes = [16, 8], strides = [1, 1]} : vector<16x96xf32> to vector<16x8xf32>
    %87 = vector.extract_strided_slice %31 {offsets = [0, 48], sizes = [16, 8], strides = [1, 1]} : vector<16x96xf32> to vector<16x8xf32>
    %88 = vector.extract_strided_slice %31 {offsets = [0, 80], sizes = [16, 8], strides = [1, 1]} : vector<16x96xf32> to vector<16x8xf32>
    %cst_42 = arith.constant dense<0.000000e+00> : vector<16x16xf32>
    %89 = tpu.matmul %86, %87, %cst_42 {dimension_numbers = #tpu.dot_dimension_numbers<[1], [1], [0], [0], [0, 0, 1, 0], [], []>} : vector<16x8xf32>, vector<16x8xf32>, vector<16x16xf32> -> vector<16x16xf32>
    %cst_43 = arith.constant 0.353553385 : f32
    %90 = vector.broadcast %cst_43 : f32 to vector<16x16xf32>
    %91 = arith.mulf %89, %90 : vector<16x16xf32>
    %c2_44 = arith.constant 2 : index
    %c0_45 = arith.constant 0 : index
    %c0_46 = arith.constant 0 : index
    %92 = vector.load %arg3[%c2_44, %c0_45, %c0_46] : memref<4x16x16xf32, #tpu.memory_space<vmem>>, vector<1x16x16xf32>
    %93 = vector.shape_cast %92 : vector<1x16x16xf32> to vector<16x16xf32>
    %94 = arith.addf %91, %93 : vector<16x16xf32>
    %cst_47 = arith.constant dense<0xFF800000> : vector<16xf32>
    %95 = vector.multi_reduction <maximumf>, %94, %cst_47 [1] : vector<16x16xf32> to vector<16xf32>
    %96 = vector.shape_cast %95 : vector<16xf32> to vector<16x1xf32>
    %97 = vector.broadcast %96 : vector<16x1xf32> to vector<16x16xf32>
    %98 = arith.subf %94, %97 : vector<16x16xf32>
    %99 = math.exp %98 : vector<16x16xf32>
    %cst_48 = arith.constant dense<0.000000e+00> : vector<16xf32>
    %100 = vector.multi_reduction <add>, %99, %cst_48 [1] : vector<16x16xf32> to vector<16xf32>
    %101 = vector.shape_cast %100 : vector<16xf32> to vector<16x1xf32>
    %102 = tpu.reciprocal %101 : vector<16x1xf32> -> vector<16x1xf32>
    %103 = vector.broadcast %102 : vector<16x1xf32> to vector<16x16xf32>
    %104 = arith.mulf %99, %103 : vector<16x16xf32>
    %c2_49 = arith.constant 2 : index
    %c0_50 = arith.constant 0 : index
    %c0_51 = arith.constant 0 : index
    %105 = vector.load %arg5[%c2_49, %c0_50, %c0_51] : memref<4x16x16xf32, #tpu.memory_space<vmem>>, vector<1x16x16xf32>
    %106 = vector.shape_cast %105 : vector<1x16x16xf32> to vector<16x16xf32>
    %107 = vector.shape_cast %104 : vector<16x16xf32> to vector<1x16x16xf32>
    tpu.vector_store %arg5[%c2_49, %c0_50, %c0_51], %107 {strides = array<i32>} : memref<4x16x16xf32, #tpu.memory_space<vmem>>, vector<1x16x16xf32>,
    %cst_52 = arith.constant dense<0.000000e+00> : vector<16x8xf32>
    %108 = tpu.matmul %104, %88, %cst_52 {dimension_numbers = #tpu.dot_dimension_numbers<[1], [0], [0], [1], [0, 0, 1, 1], [], []>} : vector<16x16xf32>, vector<16x8xf32>, vector<16x8xf32> -> vector<16x8xf32>
    %109 = vector.extract_strided_slice %32 {offsets = [16, 0], sizes = [8, 32], strides = [1, 1]} : vector<32x32xf32> to vector<8x32xf32>
    %cst_53 = arith.constant dense<0.000000e+00> : vector<16x32xf32>
    %110 = tpu.matmul %108, %109, %cst_53 {dimension_numbers = #tpu.dot_dimension_numbers<[1], [0], [0], [1], [0, 0, 1, 1], [], []>} : vector<16x8xf32>, vector<8x32xf32>, vector<16x32xf32> -> vector<16x32xf32>
    %111 = arith.addf %85, %110 : vector<16x32xf32>
    %112 = vector.extract_strided_slice %31 {offsets = [0, 24], sizes = [16, 8], strides = [1, 1]} : vector<16x96xf32> to vector<16x8xf32>
    %113 = vector.extract_strided_slice %31 {offsets = [0, 56], sizes = [16, 8], strides = [1, 1]} : vector<16x96xf32> to vector<16x8xf32>
    %114 = vector.extract_strided_slice %31 {offsets = [0, 88], sizes = [16, 8], strides = [1, 1]} : vector<16x96xf32> to vector<16x8xf32>
    %cst_54 = arith.constant dense<0.000000e+00> : vector<16x16xf32>
    %115 = tpu.matmul %112, %113, %cst_54 {dimension_numbers = #tpu.dot_dimension_numbers<[1], [1], [0], [0], [0, 0, 1, 0], [], []>} : vector<16x8xf32>, vector<16x8xf32>, vector<16x16xf32> -> vector<16x16xf32>
    %cst_55 = arith.constant 0.353553385 : f32
    %116 = vector.broadcast %cst_55 : f32 to vector<16x16xf32>
    %117 = arith.mulf %115, %116 : vector<16x16xf32>
    %c3_56 = arith.constant 3 : index
    %c0_57 = arith.constant 0 : index
    %c0_58 = arith.constant 0 : index
    %118 = vector.load %arg3[%c3_56, %c0_57, %c0_58] : memref<4x16x16xf32, #tpu.memory_space<vmem>>, vector<1x16x16xf32>
    %119 = vector.shape_cast %118 : vector<1x16x16xf32> to vector<16x16xf32>
    %120 = arith.addf %117, %119 : vector<16x16xf32>
    %cst_59 = arith.constant dense<0xFF800000> : vector<16xf32>
    %121 = vector.multi_reduction <maximumf>, %120, %cst_59 [1] : vector<16x16xf32> to vector<16xf32>
    %122 = vector.shape_cast %121 : vector<16xf32> to vector<16x1xf32>
    %123 = vector.broadcast %122 : vector<16x1xf32> to vector<16x16xf32>
    %124 = arith.subf %120, %123 : vector<16x16xf32>
    %125 = math.exp %124 : vector<16x16xf32>
    %cst_60 = arith.constant dense<0.000000e+00> : vector<16xf32>
    %126 = vector.multi_reduction <add>, %125, %cst_60 [1] : vector<16x16xf32> to vector<16xf32>
    %127 = vector.shape_cast %126 : vector<16xf32> to vector<16x1xf32>
    %128 = tpu.reciprocal %127 : vector<16x1xf32> -> vector<16x1xf32>
    %129 = vector.broadcast %128 : vector<16x1xf32> to vector<16x16xf32>
    %130 = arith.mulf %125, %129 : vector<16x16xf32>
    %c3_61 = arith.constant 3 : index
    %c0_62 = arith.constant 0 : index
    %c0_63 = arith.constant 0 : index
    %131 = vector.load %arg5[%c3_61, %c0_62, %c0_63] : memref<4x16x16xf32, #tpu.memory_space<vmem>>, vector<1x16x16xf32>
    %132 = vector.shape_cast %131 : vector<1x16x16xf32> to vector<16x16xf32>
    %133 = vector.shape_cast %130 : vector<16x16xf32> to vector<1x16x16xf32>
    tpu.vector_store %arg5[%c3_61, %c0_62, %c0_63], %133 {strides = array<i32>} : memref<4x16x16xf32, #tpu.memory_space<vmem>>, vector<1x16x16xf32>,
    %cst_64 = arith.constant dense<0.000000e+00> : vector<16x8xf32>
    %134 = tpu.matmul %130, %114, %cst_64 {dimension_numbers = #tpu.dot_dimension_numbers<[1], [0], [0], [1], [0, 0, 1, 1], [], []>} : vector<16x16xf32>, vector<16x8xf32>, vector<16x8xf32> -> vector<16x8xf32>
    %135 = vector.extract_strided_slice %32 {offsets = [24, 0], sizes = [8, 32], strides = [1, 1]} : vector<32x32xf32> to vector<8x32xf32>
    %cst_65 = arith.constant dense<0.000000e+00> : vector<16x32xf32>
    %136 = tpu.matmul %134, %135, %cst_65 {dimension_numbers = #tpu.dot_dimension_numbers<[1], [0], [0], [1], [0, 0, 1, 1], [], []>} : vector<16x8xf32>, vector<8x32xf32>, vector<16x32xf32> -> vector<16x32xf32>
    %137 = arith.addf %111, %136 : vector<16x32xf32>
    %138 = vector.broadcast %1 : vector<1x32xf32> to vector<16x32xf32>
    %139 = arith.addf %137, %138 : vector<16x32xf32>
    %140 = arith.addf %0, %139 : vector<16x32xf32>
    %cst_66 = arith.constant dense<0.000000e+00> : vector<16xf32>
    %141 = vector.multi_reduction <add>, %140, %cst_66 [1] : vector<16x32xf32> to vector<16xf32>
    %142 = vector.shape_cast %141 : vector<16xf32> to vector<16x1xf32>
    %cst_67 = arith.constant 3.200000e+01 : f32
    %143 = vector.broadcast %cst_67 : f32 to vector<16x1xf32>
    %144 = arith.divf %142, %143 : vector<16x1xf32>
    %145 = vector.broadcast %144 : vector<16x1xf32> to vector<16x32xf32>
    %146 = arith.subf %140, %145 : vector<16x32xf32>
    %147 = arith.mulf %146, %146 : vector<16x32xf32>
    %cst_68 = arith.constant dense<0.000000e+00> : vector<16xf32>
    %148 = vector.multi_reduction <add>, %147, %cst_68 [1] : vector<16x32xf32> to vector<16xf32>
    %149 = vector.shape_cast %148 : vector<16xf32> to vector<16x1xf32>
    %cst_69 = arith.constant 3.200000e+01 : f32
    %150 = vector.broadcast %cst_69 : f32 to vector<16x1xf32>
    %151 = arith.divf %149, %150 : vector<16x1xf32>
    %152 = vector.broadcast %144 : vector<16x1xf32> to vector<16x32xf32>
    %153 = arith.subf %140, %152 : vector<16x32xf32>
    %cst_70 = arith.constant 9.99999974E-6 : f32
    %154 = vector.broadcast %cst_70 : f32 to vector<16x1xf32>
    %155 = arith.addf %151, %154 : vector<16x1xf32>
    %156 = math.rsqrt %155 : vector<16x1xf32>
    %157 = vector.broadcast %156 : vector<16x1xf32> to vector<16x32xf32>
    %158 = arith.mulf %153, %157 : vector<16x32xf32>
    %159 = vector.broadcast %4 : vector<1x32xf32> to vector<16x32xf32>
    %160 = arith.mulf %158, %159 : vector<16x32xf32>
    %161 = vector.broadcast %5 : vector<1x32xf32> to vector<16x32xf32>
    %162 = arith.addf %160, %161 : vector<16x32xf32>
    %c0_71 = arith.constant 0 : index
    %c256 = arith.constant 256 : index
    %163 = vector.load %arg1[%c0_71, %c256] : memref<32x512xf32, #tpu.memory_space<vmem>>, vector<32x128xf32>
    %cst_72 = arith.constant dense<0.000000e+00> : vector<16x128xf32>
    %164 = tpu.matmul %162, %163, %cst_72 {dimension_numbers = #tpu.dot_dimension_numbers<[1], [0], [0], [1], [0, 0, 1, 1], [], []>} : vector<16x32xf32>, vector<32x128xf32>, vector<16x128xf32> -> vector<16x128xf32>
    %165 = vector.broadcast %6 : vector<1x128xf32> to vector<16x128xf32>
    %166 = arith.addf %164, %165 : vector<16x128xf32>
    %cst_73 = arith.constant 0.000000e+00 : f32
    %167 = vector.broadcast %cst_73 : f32 to vector<16x128xf32>
    %168 = arith.maximumf %166, %167 : vector<16x128xf32>
    %c0_74 = arith.constant 0 : index
    %c384 = arith.constant 384 : index
    %169 = vector.load %arg1[%c0_74, %c384] : memref<32x512xf32, #tpu.memory_space<vmem>>, vector<32x128xf32>
    %cst_75 = arith.constant dense<0.000000e+00> : vector<16x32xf32>
    %170 = tpu.matmul %168, %169, %cst_75 {dimension_numbers = #tpu.dot_dimension_numbers<[1], [1], [0], [0], [0, 0, 1, 0], [], []>} : vector<16x128xf32>, vector<32x128xf32>, vector<16x32xf32> -> vector<16x32xf32>
    %171 = vector.broadcast %7 : vector<1x32xf32> to vector<16x32xf32>
    %172 = arith.addf %170, %171 : vector<16x32xf32>
    %173 = arith.addf %140, %172 : vector<16x32xf32>
    %c0_76 = arith.constant 0 : index
    %c0_77 = arith.constant 0 : index
    %174 = vector.load %arg4[%c0_76, %c0_77] : memref<16x32xf32, #tpu.memory_space<vmem>>, vector<16x32xf32>
    tpu.vector_store %arg4[%c0_76, %c0_77], %173 {strides = array<i32>} : memref<16x32xf32, #tpu.memory_space<vmem>>, vector<16x32xf32>,
    return
  }
}

</mosaic_0001>

<llo_original>
// kernel: block_forward.1
$region0: #{block_forward.1}
  #allocation0 [shape = 'u32[]', space=smem, size = 0x4, offset = 0x4, fixed_abs, tag = 'smem constant byte address 0x4 - core index']
  #allocation1 [shape = 'u32[72,128]{1,0:T(1,128)}', space=vmem, size = 0x9000, scoped, tag = 'internal scratch']
  %s0 = inlined_call_operand.hbm [shape: f32[16,32], index: 0, kind: input, shape index: {}]
  %s1 = inlined_call_operand.hbm [shape: f32[32,512], index: 1, kind: input, shape index: {}]
  %s2 = inlined_call_operand.hbm [shape: f32[8,128], index: 2, kind: input, shape index: {}]
  %s3 = inlined_call_operand.hbm [shape: f32[4,16,16], index: 3, kind: input, shape index: {}]
  %s4 = inlined_call_operand.hbm [shape: f32[16,32], index: 4, kind: output, shape index: {0}]
  %s5 = inlined_call_operand.vmem [shape: f32[4,16,16], index: 5, kind: output, shape index: {1}]
  %6 = xla_tuple %s4, %s5
  %s7 = sld [smem:[#allocation0]]
  $region50: #{block_forward.1} parent=0
    _
  %s9 = ssub.s32 1, %s7
  %s10 = scalar_select 0, %s9, %s7
  $region1: #{block_forward.1} parent=0
    #allocation2 [shape = 'u8[8192]{0}', space=vmem, size = 0x2000, scoped, tag = 'input window, operand 0, single buffered']
    #allocation3 [shape = 's32[1]{0}', space=sflag, size = 0x4, scoped, tag = 'scoped memory for block_forward.1']
    #allocation4 [shape = 's32[1]{0}', space=sflag, size = 0x4, scoped, tag = 'scoped memory for block_forward.1']
    #allocation5 [shape = 'u8[65536]{0}', space=vmem, size = 0x10000, scoped, tag = 'input window, operand 1, single buffered']
    #allocation6 [shape = 's32[1]{0}', space=sflag, size = 0x4, scoped, tag = 'scoped memory for block_forward.1']
    #allocation7 [shape = 'u8[4096]{0}', space=vmem, size = 0x1000, scoped, tag = 'input window, operand 2, single buffered']
    #allocation8 [shape = 'u8[32768]{0}', space=vmem, size = 0x8000, scoped, tag = 'input window, operand 3, single buffered']
    #allocation9 [shape = 's32[1]{0}', space=sflag, size = 0x4, scoped, tag = 'scoped memory for block_forward.1']
    #allocation10 [shape = 'u8[8192]{0}', space=vmem, size = 0x2000, scoped, tag = 'output window, operand 0, single buffered']
    %11 = vsyncpa [#allocation3], 0
    %12 = vsyncpa [#allocation6], 0
    %13 = vsyncpa [#allocation9], 0
    %14 = vsyncpa [#allocation4], 0
    // Predicated region
    $region2: #{block_forward.1} parent=1 // pred_check
      _
    $region3: #{block_forward.1} parent=1 // pred_check_branch
      %16 = sbr.rel (0) target = $region5
    $region4: #{block_forward.1} parent=1 // pred_region
      %18 = vsyncadd [#allocation3], 0
      %s19 = sshll.u32 %s0, 4
      %s20 = int_to_ptr.hbm [resolvable:$true] %s19
      %s21 = sshll.u32 [#allocation2], 4
      %s22 = int_to_ptr.vmem [resolvable:$true] %s21
      %27 = dma.hbm_to_vmem [thread:$0]  %s20, 256, %s22, [#allocation3], 128, 128, 8
    $region5: #{block_forward.1} parent=1 // pred_fallthru
      _
    // Predicated region
    $region6: #{block_forward.1} parent=1 // pred_check
      _
    $region7: #{block_forward.1} parent=1 // pred_check_branch
      %29 = sbr.rel (0) target = $region9
    $region8: #{block_forward.1} parent=1 // pred_region
      %31 = vsyncadd [#allocation6], 0
      %s32 = sshll.u32 %s1, 4
      %s33 = int_to_ptr.hbm [resolvable:$true] %s32
      %s34 = sshll.u32 [#allocation5], 4
      %s35 = int_to_ptr.vmem [resolvable:$true] %s34
      %40 = dma.hbm_to_vmem [thread:$0]  %s33, 2048, %s35, [#allocation6], 512, 512, 32
    $region9: #{block_forward.1} parent=1 // pred_fallthru
      _
    // Predicated region
    $region10: #{block_forward.1} parent=1 // pred_check
      _
    $region11: #{block_forward.1} parent=1 // pred_check_branch
      %42 = sbr.rel (0) target = $region13
    $region12: #{block_forward.1} parent=1 // pred_region
      %44 = vsyncadd [#allocation6], 0
      %s46 = sshll.u32 %s2, 4
      %s47 = int_to_ptr.hbm [resolvable:$true] %s46
      %s48 = sshll.u32 [#allocation7], 4
      %s49 = int_to_ptr.vmem [resolvable:$true] %s48
      %51 = dma.hbm_to_vmem [thread:$0]  %s47, 128, %s49, [#allocation6]
    $region13: #{block_forward.1} parent=1 // pred_fallthru
      _
    // Predicated region
    $region14: #{block_forward.1} parent=1 // pred_check
      _
    $region15: #{block_forward.1} parent=1 // pred_check_branch
      %53 = sbr.rel (0) target = $region17
    $region16: #{block_forward.1} parent=1 // pred_region
      %55 = vsyncadd [#allocation9], 0
      %s56 = sshll.u32 %s3, 4
      %s57 = int_to_ptr.hbm [resolvable:$true] %s56
      %s58 = sshll.u32 [#allocation8], 4
      %s59 = int_to_ptr.vmem [resolvable:$true] %s58
      %64 = dma.hbm_to_vmem [thread:$0]  %s57, 1024, %s59, [#allocation9], 128, 128, 8
    $region17: #{block_forward.1} parent=1 // pred_fallthru
      _
    // Predicated region
    $region18: #{block_forward.1} parent=1 // pred_check
      _
    $region19: #{block_forward.1} parent=1 // pred_check_branch
      %66 = sbr.rel (0) target = $region21
    $region20: #{block_forward.1} parent=1 // pred_region
      %68 = dma.done [#allocation3], 256
    $region21: #{block_forward.1} parent=1 // pred_fallthru
      _
    // Predicated region
    $region22: #{block_forward.1} parent=1 // pred_check
      _
    $region23: #{block_forward.1} parent=1 // pred_check_branch
      %70 = sbr.rel (0) target = $region25
    $region24: #{block_forward.1} parent=1 // pred_region
      %72 = dma.done [#allocation6], 2048
    $region25: #{block_forward.1} parent=1 // pred_fallthru
      _
    // Predicated region
    $region26: #{block_forward.1} parent=1 // pred_check
      _
    $region27: #{block_forward.1} parent=1 // pred_check_branch
      %74 = sbr.rel (0) target = $region29
    $region28: #{block_forward.1} parent=1 // pred_region
      %76 = dma.done [#allocation6], 128
    $region29: #{block_forward.1} parent=1 // pred_fallthru
      _
    // Predicated region
    $region30: #{block_forward.1} parent=1 // pred_check
      _
    $region31: #{block_forward.1} parent=1 // pred_check_branch
      %78 = sbr.rel (0) target = $region33
    $region32: #{block_forward.1} parent=1 // pred_region
      %80 = dma.done [#allocation9], 1024
    $region33: #{block_forward.1} parent=1 // pred_fallthru
      _
    %v81 = vld [vmem:[#allocation2] sm:$0xff]
    %v82 = vld [vmem:[#allocation2 + $0x8] sm:$0xff]
    %v83 = vld [vmem:[#allocation7] sm:$0x1]
    %v84 = vld [vmem:[#allocation7 + $0x1] sm:$0x1]
    %v85 = vld [vmem:[#allocation7 + $0x2] sm:$0x1]
    %v86 = vld [vmem:[#allocation7 + $0x3] sm:$0x1]
    %v87 = vld [vmem:[#allocation7 + $0x4] sm:$0x1]
    %v88 = vld [vmem:[#allocation7 + $0x5] sm:$0x1]
    %v89 = vld [vmem:[#allocation7 + $0x6] sm:$0x1]
    %vm90 = vcmask 261120
    %v91 = vsel %vm90, %v81, 0.0
    %92 = vadd.xlane.f32.xlu0 %v91
    %v93 = vpop.xlane.xlu0 %92
    %v94 = vsel %vm90, %v82, 0.0
    %95 = vadd.xlane.f32.xlu0 %v94
    %v96 = vpop.xlane.xlu0 %95
    %v97 = vrcp.pop 32.0
    %v98 = vmul.f32 32.0, %v97
    %v99 = vsub.f32 1.0, %v98
    %v100 = vmul.f32 %v97, %v99
    %v101 = vadd.f32 %v97, %v100
    %vm102 = vweird.f32 %v97
    %v103 = vsel %vm102, %v97, %v101
    %v104 = vmul.f32 %v93, %v103
    %v105 = vmul.f32 %v96, %v103
    %v106 = vsub.f32 %v81, %v104
    %v107 = vsub.f32 %v82, %v105
    %v108 = vmul.f32 %v106, %v106
    %v109 = vmul.f32 %v107, %v107
    %v110 = vsel %vm90, %v108, 0.0
    %111 = vadd.xlane.f32.xlu0 %v110
    %v112 = vpop.xlane.xlu0 %111
    %v113 = vsel %vm90, %v109, 0.0
    %114 = vadd.xlane.f32.xlu0 %v113
    %v115 = vpop.xlane.xlu0 %114
    %v116 = vmul.f32 %v112, %v103
    %v117 = vmul.f32 %v115, %v103
    %v118 = vadd.f32 %v116, 1e-05
    %v119 = vadd.f32 %v117, 1e-05
    %v120 = vrsqrt.pop %v118
    %v121 = vmul.f32 %v120, %v118
    %v122 = vmul.f32 %v121, %v120
    %v123 = vmul.f32 0.5, %v122
    %v124 = vsub.f32 1.5, %v123
    %v125 = vmul.f32 %v120, %v124
    %vm126 = vweird.f32 %v118
    %vm127 = vweird.f32 %v120
    %vm128 = vmor %vm126, %vm127
    %v129 = vsel %vm128, %v120, %v125
    %v130 = vrsqrt.pop %v119
    %v131 = vmul.f32 %v130, %v119
    %v132 = vmul.f32 %v131, %v130
    %v133 = vmul.f32 0.5, %v132
    %v134 = vsub.f32 1.5, %v133
    %v135 = vmul.f32 %v130, %v134
    %vm136 = vweird.f32 %v119
    %vm137 = vweird.f32 %v130
    %vm138 = vmor %vm136, %vm137
    %v139 = vsel %vm138, %v130, %v135
    %v140 = vmul.f32 %v106, %v129
    %v141 = vmul.f32 %v107, %v139
    %v142 = vperm.slane %v84, 0
    %v143 = vmul.f32 %v140, %v142
    %v144 = vmul.f32 %v141, %v142
    %v145 = vperm.slane %v85, 0
    %v146 = vadd.f32 %v143, %v145
    %v147 = vadd.f32 %v144, %v145
    %v148 = vld [vmem:[#allocation5] sm:$0xff]
    %v149 = vld [vmem:[#allocation5 + $0x20] sm:$0xff]
    %v150 = vld [vmem:[#allocation5 + $0x40] sm:$0xff]
    %v151 = vld [vmem:[#allocation5 + $0x60] sm:$0xff]
    %v153 = vsel %vm90, %v146, 0
    %v156 = vsel %vm90, %v147, 0
    %158 = vmatpush.msra.mxu0 0.0
    %159 = vmatpush.msra.mxu0 0.0
    %160 = vmatpush.msra.mxu0 0.0
    %161 = vmatpush.msra.mxu0 0.0
    %162 = vmatpush.msra.mxu0 0.0
    %163 = vmatpush.msra.mxu0 0.0
    %164 = vmatpush.msra.mxu0 0.0
    %165 = vmatpush.msra.mxu0 0.0
    %166 = vmatpush.msra.mxu0 0.0
    %167 = vmatpush.msra.mxu0 0.0
    %168 = vmatpush.msra.mxu0 0.0
    %169 = vmatpush.msra.mxu0 0.0
    %170 = vmatpush.msra.mxu0 %v151
    %171 = vmatpush.msra.mxu0 %v150
    %172 = vmatpush.msra.mxu0 %v149
    %173 = vmatpush.msra.mxu0 %v148
    %174 = vmatmul.f32.gmra.mxu0 %v153
    %v175 = vpop.f32.mrf.mxu0
    %v176 = vadd.f32 0.0, %v175
    %177 = vmatmul.f32.gmra.mxu0 %v156
    %v178 = vpop.f32.mrf.mxu0
    %v179 = vadd.f32 0.0, %v178
    %180 = vdwg.mxu0
    %v181 = vld [vmem:[#allocation5 + $0x8] sm:$0xff]
    %v182 = vld [vmem:[#allocation5 + $0x28] sm:$0xff]
    %v183 = vld [vmem:[#allocation5 + $0x48] sm:$0xff]
    %v184 = vld [vmem:[#allocation5 + $0x68] sm:$0xff]
    %187 = vrot.lane.b32.xlu0 %v176, 96
    %v188 = vpop.permute.xlu0 %187
    %189 = vrot.lane.b32.xlu0 %v179, 96
    %v190 = vpop.permute.xlu0 %189
    %vm191 = vcmask 64512
    %v192 = vsel %vm191, %v176, 0
    %v194 = vsel %vm191, %v179, 0
    %v196 = vsel %vm191, %v188, 0
    %v198 = vsel %vm191, %v190, 0
    %200 = vmatpush.xpose.msra.mxu0 0.0
    %201 = vmatpush.xpose.msra.mxu0 0.0
    %202 = vmatpush.xpose.msra.mxu0 0.0
    %203 = vmatpush.xpose.msra.mxu0 0.0
    %204 = vmatpush.xpose.msra.mxu0 0.0
    %205 = vmatpush.xpose.msra.mxu0 0.0
    %206 = vmatpush.xpose.msra.mxu0 0.0
    %207 = vmatpush.xpose.msra.mxu0 0.0
    %208 = vmatpush.xpose.msra.mxu0 0.0
    %209 = vmatpush.xpose.msra.mxu0 0.0
    %210 = vmatpush.xpose.msra.mxu0 0.0
    %211 = vmatpush.xpose.msra.mxu0 0.0
    %212 = vmatpush.xpose.msra.mxu0 0.0
    %213 = vmatpush.xpose.msra.mxu0 0.0
    %214 = vmatpush.xpose.msra.mxu0 %v198
    %215 = vmatpush.xpose.msra.mxu0 %v196
    %216 = vmatmul.f32.gmra.mxu0 %v192
    %v217 = vpop.f32.mrf.mxu0
    %v218 = vadd.f32 0.0, %v217
    %219 = vmatmul.f32.gmra.mxu0 %v194
    %v220 = vpop.f32.mrf.mxu0
    %v221 = vadd.f32 0.0, %v220
    %222 = vdwg.mxu0
    %v223 = vmul.f32 %v218, 0.35355338
    %v224 = vmul.f32 %v221, 0.35355338
    %v225 = vld [vmem:[#allocation8] sm:$0xff]
    %v226 = vld [vmem:[#allocation8 + $0x8] sm:$0xff]
    %v227 = vadd.f32 %v223, %v225
    %v228 = vadd.f32 %v224, %v226
    %vm229 = vcmask 130048
    %v230 = vsel %vm229, %v227, -inf
    %231 = vmax.xlane.f32.xlu0 %v230
    %v232 = vpop.xlane.xlu0 %231
    %v233 = vsel %vm229, %v228, -inf
    %234 = vmax.xlane.f32.xlu0 %v233
    %v235 = vpop.xlane.xlu0 %234
    %v236 = vsub.f32 %v227, %v232
    %v237 = vsub.f32 %v228, %v235
    %v238 = vmul.f32 %v236, 1.442695
    %v239 = vpow.pop %v238
    %v240 = vmul.f32 %v237, 1.442695
    %v241 = vpow.pop %v240
    %v242 = vsel %vm229, %v239, 0.0
    %243 = vadd.xlane.f32.xlu0 %v242
    %v244 = vpop.xlane.xlu0 %243
    %v245 = vsel %vm229, %v241, 0.0
    %246 = vadd.xlane.f32.xlu0 %v245
    %v247 = vpop.xlane.xlu0 %246
    %v248 = vrcp.pop %v244
    %v249 = vmul.f32 %v244, %v248
    %v250 = vsub.f32 1.0, %v249
    %v251 = vmul.f32 %v248, %v250
    %v252 = vadd.f32 %v248, %v251
    %vm253 = vweird.f32 %v244
    %vm254 = vweird.f32 %v248
    %vm255 = vmor %vm253, %vm254
    %v256 = vsel %vm255, %v248, %v252
    %v257 = vand.u32 2147483647, %v244
    %vm258 = vcmp.eq.f32.partialorder %v257, 8.507059e+37
    %v259 = vand.u32 %v244, 2147483648
    %v260 = vor.u32 1.1754944e-38, %v259
    %v261 = vsel %vm258, %v260, %v256
    %v262 = vrcp.pop %v247
    %v263 = vmul.f32 %v247, %v262
    %v264 = vsub.f32 1.0, %v263
    %v265 = vmul.f32 %v262, %v264
    %v266 = vadd.f32 %v262, %v265
    %vm267 = vweird.f32 %v247
    %vm268 = vweird.f32 %v262
    %vm269 = vmor %vm267, %vm268
    %v270 = vsel %vm269, %v262, %v266
    %v271 = vand.u32 2147483647, %v247
    %vm272 = vcmp.eq.f32.partialorder %v271, 8.507059e+37
    %v273 = vand.u32 %v247, 2147483648
    %v274 = vor.u32 1.1754944e-38, %v273
    %v275 = vsel %vm272, %v274, %v270
    %v276 = vmul.f32 %v239, %v261
    %v277 = vmul.f32 %v241, %v275
    %278 = vst.msk [vmem:[%s5] sm:$0xff] %vm229, %v276
    %279 = vst.msk [vmem:[%s5 + $0x8] sm:$0xff] %vm229, %v277
    %280 = vrot.lane.b32.xlu0 %v176, 64
    %v281 = vpop.permute.xlu0 %280
    %282 = vrot.lane.b32.xlu0 %v179, 64
    %v283 = vpop.permute.xlu0 %282
    %v287 = vsel %vm229, %v276, 0
    %v290 = vsel %vm229, %v277, 0
    %292 = vmatpush.msra.mxu0 0.0
    %293 = vmatpush.msra.mxu0 0.0
    %294 = vmatpush.msra.mxu0 0.0
    %295 = vmatpush.msra.mxu0 0.0
    %296 = vmatpush.msra.mxu0 0.0
    %297 = vmatpush.msra.mxu0 0.0
    %298 = vmatpush.msra.mxu0 0.0
    %299 = vmatpush.msra.mxu0 0.0
    %300 = vmatpush.msra.mxu0 0.0
    %301 = vmatpush.msra.mxu0 0.0
    %302 = vmatpush.msra.mxu0 0.0
    %303 = vmatpush.msra.mxu0 0.0
    %304 = vmatpush.msra.mxu0 0.0
    %305 = vmatpush.msra.mxu0 0.0
    %306 = vmatpush.msra.mxu0 %v283
    %307 = vmatpush.msra.mxu0 %v281
    %308 = vmatmul.f32.gmra.mxu0 %v287
    %v309 = vpop.f32.mrf.mxu0
    %v310 = vadd.f32 0.0, %v309
    %311 = vmatmul.f32.gmra.mxu0 %v290
    %v312 = vpop.f32.mrf.mxu0
    %v313 = vadd.f32 0.0, %v312
    %314 = vdwg.mxu0
    %315 = vrot.lane.b32.xlu0 %v176, 120
    %v316 = vpop.permute.xlu0 %315
    %317 = vrot.lane.b32.xlu0 %v179, 120
    %v318 = vpop.permute.xlu0 %317
    %319 = vrot.lane.b32.xlu0 %v176, 88
    %v320 = vpop.permute.xlu0 %319
    %321 = vrot.lane.b32.xlu0 %v179, 88
    %v322 = vpop.permute.xlu0 %321
    %v323 = vsel %vm191, %v316, 0
    %v325 = vsel %vm191, %v318, 0
    %v327 = vsel %vm191, %v320, 0
    %v329 = vsel %vm191, %v322, 0
    %331 = vmatpush.xpose.msra.mxu0 0.0
    %332 = vmatpush.xpose.msra.mxu0 0.0
    %333 = vmatpush.xpose.msra.mxu0 0.0
    %334 = vmatpush.xpose.msra.mxu0 0.0
    %335 = vmatpush.xpose.msra.mxu0 0.0
    %336 = vmatpush.xpose.msra.mxu0 0.0
    %337 = vmatpush.xpose.msra.mxu0 0.0
    %338 = vmatpush.xpose.msra.mxu0 0.0
    %339 = vmatpush.xpose.msra.mxu0 0.0
    %340 = vmatpush.xpose.msra.mxu0 0.0
    %341 = vmatpush.xpose.msra.mxu0 0.0
    %342 = vmatpush.xpose.msra.mxu0 0.0
    %343 = vmatpush.xpose.msra.mxu0 0.0
    %344 = vmatpush.xpose.msra.mxu0 0.0
    %345 = vmatpush.xpose.msra.mxu0 %v329
    %346 = vmatpush.xpose.msra.mxu0 %v327
    %347 = vmatmul.f32.gmra.mxu0 %v323
    %v348 = vpop.f32.mrf.mxu0
    %v349 = vadd.f32 0.0, %v348
    %350 = vmatmul.f32.gmra.mxu0 %v325
    %v351 = vpop.f32.mrf.mxu0
    %v352 = vadd.f32 0.0, %v351
    %353 = vdwg.mxu0
    %v354 = vmul.f32 %v349, 0.35355338
    %v355 = vmul.f32 %v352, 0.35355338
    %s356 = scalar_lea.vmem [#allocation8], 16
    %v357 = vld [vmem:[%s356] sm:$0xff]
    %v358 = vld [vmem:[%s356 + $0x8] sm:$0xff]
    %v359 = vadd.f32 %v354, %v357
    %v360 = vadd.f32 %v355, %v358
    %v361 = vsel %vm229, %v359, -inf
    %362 = vmax.xlane.f32.xlu0 %v361
    %v363 = vpop.xlane.xlu0 %362
    %v364 = vsel %vm229, %v360, -inf
    %365 = vmax.xlane.f32.xlu0 %v364
    %v366 = vpop.xlane.xlu0 %365
    %v367 = vsub.f32 %v359, %v363
    %v368 = vsub.f32 %v360, %v366
    %v369 = vmul.f32 %v367, 1.442695
    %v370 = vpow.pop %v369
    %v371 = vmul.f32 %v368, 1.442695
    %v372 = vpow.pop %v371
    %v373 = vsel %vm229, %v370, 0.0
    %374 = vadd.xlane.f32.xlu0 %v373
    %v375 = vpop.xlane.xlu0 %374
    %v376 = vsel %vm229, %v372, 0.0
    %377 = vadd.xlane.f32.xlu0 %v376
    %v378 = vpop.xlane.xlu0 %377
    %v379 = vrcp.pop %v375
    %v380 = vmul.f32 %v375, %v379
    %v381 = vsub.f32 1.0, %v380
    %v382 = vmul.f32 %v379, %v381
    %v383 = vadd.f32 %v379, %v382
    %vm384 = vweird.f32 %v375
    %vm385 = vweird.f32 %v379
    %vm386 = vmor %vm384, %vm385
    %v387 = vsel %vm386, %v379, %v383
    %v388 = vand.u32 2147483647, %v375
    %vm389 = vcmp.eq.f32.partialorder %v388, 8.507059e+37
    %v390 = vand.u32 %v375, 2147483648
    %v391 = vor.u32 1.1754944e-38, %v390
    %v392 = vsel %vm389, %v391, %v387
    %v393 = vrcp.pop %v378
    %v394 = vmul.f32 %v378, %v393
    %v395 = vsub.f32 1.0, %v394
    %v396 = vmul.f32 %v393, %v395
    %v397 = vadd.f32 %v393, %v396
    %vm398 = vweird.f32 %v378
    %vm399 = vweird.f32 %v393
    %vm400 = vmor %vm398, %vm399
    %v401 = vsel %vm400, %v393, %v397
    %v402 = vand.u32 2147483647, %v378
    %vm403 = vcmp.eq.f32.partialorder %v402, 8.507059e+37
    %v404 = vand.u32 %v378, 2147483648
    %v405 = vor.u32 1.1754944e-38, %v404
    %v406 = vsel %vm403, %v405, %v401
    %v407 = vmul.f32 %v370, %v392
    %v408 = vmul.f32 %v372, %v406
    %s409 = scalar_lea.vmem %s5, 16
    %410 = vst.msk [vmem:[%s409] sm:$0xff] %vm229, %v407
    %411 = vst.msk [vmem:[%s409 + $0x8] sm:$0xff] %vm229, %v408
    %412 = vrot.lane.b32.xlu0 %v176, 56
    %v413 = vpop.permute.xlu0 %412
    %414 = vrot.lane.b32.xlu0 %v179, 56
    %v415 = vpop.permute.xlu0 %414
    %v419 = vsel %vm229, %v407, 0
    %v422 = vsel %vm229, %v408, 0
    %424 = vmatpush.msra.mxu0 0.0
    %425 = vmatpush.msra.mxu0 0.0
    %426 = vmatpush.msra.mxu0 0.0
    %427 = vmatpush.msra.mxu0 0.0
    %428 = vmatpush.msra.mxu0 0.0
    %429 = vmatpush.msra.mxu0 0.0
    %430 = vmatpush.msra.mxu0 0.0
    %431 = vmatpush.msra.mxu0 0.0
    %432 = vmatpush.msra.mxu0 0.0
    %433 = vmatpush.msra.mxu0 0.0
    %434 = vmatpush.msra.mxu0 0.0
    %435 = vmatpush.msra.mxu0 0.0
    %436 = vmatpush.msra.mxu0 0.0
    %437 = vmatpush.msra.mxu0 0.0
    %438 = vmatpush.msra.mxu0 %v415
    %439 = vmatpush.msra.mxu0 %v413
    %440 = vmatmul.f32.gmra.mxu0 %v419
    %v441 = vpop.f32.mrf.mxu0
    %v442 = vadd.f32 0.0, %v441
    %443 = vmatmul.f32.gmra.mxu0 %v422
    %v444 = vpop.f32.mrf.mxu0
    %v445 = vadd.f32 0.0, %v444
    %446 = vdwg.mxu0
    %v448 = vsel %vm191, %v442, 0
    %v451 = vsel %vm191, %v445, 0
    %453 = vmatpush.msra.mxu0 0.0
    %454 = vmatpush.msra.mxu0 0.0
    %455 = vmatpush.msra.mxu0 0.0
    %456 = vmatpush.msra.mxu0 0.0
    %457 = vmatpush.msra.mxu0 0.0
    %458 = vmatpush.msra.mxu0 0.0
    %459 = vmatpush.msra.mxu0 0.0
    %460 = vmatpush.msra.mxu0 0.0
    %461 = vmatpush.msra.mxu0 0.0
    %462 = vmatpush.msra.mxu0 0.0
    %463 = vmatpush.msra.mxu0 0.0
    %464 = vmatpush.msra.mxu0 0.0
    %465 = vmatpush.msra.mxu0 0.0
    %466 = vmatpush.msra.mxu0 0.0
    %467 = vmatpush.msra.mxu0 0.0
    %468 = vmatpush.msra.mxu0 %v182
    %469 = vmatmul.f32.gmra.mxu0 %v448
    %v470 = vpop.f32.mrf.mxu0
    %v471 = vadd.f32 0.0, %v470
    %472 = vmatmul.f32.gmra.mxu0 %v451
    %v473 = vpop.f32.mrf.mxu0
    %v474 = vadd.f32 0.0, %v473
    %475 = vdwg.mxu0
    %v477 = vsel %vm191, %v310, 0
    %v480 = vsel %vm191, %v313, 0
    %482 = vmatpush.msra.mxu0 0.0
    %483 = vmatpush.msra.mxu0 0.0
    %484 = vmatpush.msra.mxu0 0.0
    %485 = vmatpush.msra.mxu0 0.0
    %486 = vmatpush.msra.mxu0 0.0
    %487 = vmatpush.msra.mxu0 0.0
    %488 = vmatpush.msra.mxu0 0.0
    %489 = vmatpush.msra.mxu0 0.0
    %490 = vmatpush.msra.mxu0 0.0
    %491 = vmatpush.msra.mxu0 0.0
    %492 = vmatpush.msra.mxu0 0.0
    %493 = vmatpush.msra.mxu0 0.0
    %494 = vmatpush.msra.mxu0 0.0
    %495 = vmatpush.msra.mxu0 0.0
    %496 = vmatpush.msra.mxu0 0.0
    %497 = vmatpush.msra.mxu0 %v181
    %498 = vmatmul.f32.gmra.mxu0 %v477
    %v499 = vpop.f32.mrf.mxu0
    %v500 = vadd.f32 %v471, %v499
    %501 = vmatmul.f32.gmra.mxu0 %v480
    %v502 = vpop.f32.mrf.mxu0
    %v503 = vadd.f32 %v474, %v502
    %504 = vdwg.mxu0
    %505 = vrot.lane.b32.xlu0 %v176, 112
    %v506 = vpop.permute.xlu0 %505
    %507 = vrot.lane.b32.xlu0 %v179, 112
    %v508 = vpop.permute.xlu0 %507
    %509 = vrot.lane.b32.xlu0 %v176, 80
    %v510 = vpop.permute.xlu0 %509
    %511 = vrot.lane.b32.xlu0 %v179, 80
    %v512 = vpop.permute.xlu0 %511
    %v513 = vsel %vm191, %v506, 0
    %v515 = vsel %vm191, %v508, 0
    %v517 = vsel %vm191, %v510, 0
    %v519 = vsel %vm191, %v512, 0
    %521 = vmatpush.xpose.msra.mxu0 0.0
    %522 = vmatpush.xpose.msra.mxu0 0.0
    %523 = vmatpush.xpose.msra.mxu0 0.0
    %524 = vmatpush.xpose.msra.mxu0 0.0
    %525 = vmatpush.xpose.msra.mxu0 0.0
    %526 = vmatpush.xpose.msra.mxu0 0.0
    %527 = vmatpush.xpose.msra.mxu0 0.0
    %528 = vmatpush.xpose.msra.mxu0 0.0
    %529 = vmatpush.xpose.msra.mxu0 0.0
    %530 = vmatpush.xpose.msra.mxu0 0.0
    %531 = vmatpush.xpose.msra.mxu0 0.0
    %532 = vmatpush.xpose.msra.mxu0 0.0
    %533 = vmatpush.xpose.msra.mxu0 0.0
    %534 = vmatpush.xpose.msra.mxu0 0.0
    %535 = vmatpush.xpose.msra.mxu0 %v519
    %536 = vmatpush.xpose.msra.mxu0 %v517
    %537 = vmatmul.f32.gmra.mxu0 %v513
    %v538 = vpop.f32.mrf.mxu0
    %v539 = vadd.f32 0.0, %v538
    %540 = vmatmul.f32.gmra.mxu0 %v515
    %v541 = vpop.f32.mrf.mxu0
    %v542 = vadd.f32 0.0, %v541
    %543 = vdwg.mxu0
    %v544 = vmul.f32 %v539, 0.35355338
    %v545 = vmul.f32 %v542, 0.35355338
    %s546 = scalar_lea.vmem [#allocation8], 32
    %v547 = vld [vmem:[%s546] sm:$0xff]
    %v548 = vld [vmem:[%s546 + $0x8] sm:$0xff]
    %v549 = vadd.f32 %v544, %v547
    %v550 = vadd.f32 %v545, %v548
    %v551 = vsel %vm229, %v549, -inf
    %552 = vmax.xlane.f32.xlu0 %v551
    %v553 = vpop.xlane.xlu0 %552
    %v554 = vsel %vm229, %v550, -inf
    %555 = vmax.xlane.f32.xlu0 %v554
    %v556 = vpop.xlane.xlu0 %555
    %v557 = vsub.f32 %v549, %v553
    %v558 = vsub.f32 %v550, %v556
    %v559 = vmul.f32 %v557, 1.442695
    %v560 = vpow.pop %v559
    %v561 = vmul.f32 %v558, 1.442695
    %v562 = vpow.pop %v561
    %v563 = vsel %vm229, %v560, 0.0
    %564 = vadd.xlane.f32.xlu0 %v563
    %v565 = vpop.xlane.xlu0 %564
    %v566 = vsel %vm229, %v562, 0.0
    %567 = vadd.xlane.f32.xlu0 %v566
    %v568 = vpop.xlane.xlu0 %567
    %v569 = vrcp.pop %v565
    %v570 = vmul.f32 %v565, %v569
    %v571 = vsub.f32 1.0, %v570
    %v572 = vmul.f32 %v569, %v571
    %v573 = vadd.f32 %v569, %v572
    %vm574 = vweird.f32 %v565
    %vm575 = vweird.f32 %v569
    %vm576 = vmor %vm574, %vm575
    %v577 = vsel %vm576, %v569, %v573
    %v578 = vand.u32 2147483647, %v565
    %vm579 = vcmp.eq.f32.partialorder %v578, 8.507059e+37
    %v580 = vand.u32 %v565, 2147483648
    %v581 = vor.u32 1.1754944e-38, %v580
    %v582 = vsel %vm579, %v581, %v577
    %v583 = vrcp.pop %v568
    %v584 = vmul.f32 %v568, %v583
    %v585 = vsub.f32 1.0, %v584
    %v586 = vmul.f32 %v583, %v585
    %v587 = vadd.f32 %v583, %v586
    %vm588 = vweird.f32 %v568
    %vm589 = vweird.f32 %v583
    %vm590 = vmor %vm588, %vm589
    %v591 = vsel %vm590, %v583, %v587
    %v592 = vand.u32 2147483647, %v568
    %vm593 = vcmp.eq.f32.partialorder %v592, 8.507059e+37
    %v594 = vand.u32 %v568, 2147483648
    %v595 = vor.u32 1.1754944e-38, %v594
    %v596 = vsel %vm593, %v595, %v591
    %v597 = vmul.f32 %v560, %v582
    %v598 = vmul.f32 %v562, %v596
    %s599 = scalar_lea.vmem %s5, 32
    %600 = vst.msk [vmem:[%s599] sm:$0xff] %vm229, %v597
    %601 = vst.msk [vmem:[%s599 + $0x8] sm:$0xff] %vm229, %v598
    %602 = vrot.lane.b32.xlu0 %v176, 48
    %v603 = vpop.permute.xlu0 %602
    %604 = vrot.lane.b32.xlu0 %v179, 48
    %v605 = vpop.permute.xlu0 %604
    %v609 = vsel %vm229, %v597, 0
    %v612 = vsel %vm229, %v598, 0
    %614 = vmatpush.msra.mxu0 0.0
    %615 = vmatpush.msra.mxu0 0.0
    %616 = vmatpush.msra.mxu0 0.0
    %617 = vmatpush.msra.mxu0 0.0
    %618 = vmatpush.msra.mxu0 0.0
    %619 = vmatpush.msra.mxu0 0.0
    %620 = vmatpush.msra.mxu0 0.0
    %621 = vmatpush.msra.mxu0 0.0
    %622 = vmatpush.msra.mxu0 0.0
    %623 = vmatpush.msra.mxu0 0.0
    %624 = vmatpush.msra.mxu0 0.0
    %625 = vmatpush.msra.mxu0 0.0
    %626 = vmatpush.msra.mxu0 0.0
    %627 = vmatpush.msra.mxu0 0.0
    %628 = vmatpush.msra.mxu0 %v605
    %629 = vmatpush.msra.mxu0 %v603
    %630 = vmatmul.f32.gmra.mxu0 %v609
    %v631 = vpop.f32.mrf.mxu0
    %v632 = vadd.f32 0.0, %v631
    %633 = vmatmul.f32.gmra.mxu0 %v612
    %v634 = vpop.f32.mrf.mxu0
    %v635 = vadd.f32 0.0, %v634
    %636 = vdwg.mxu0
    %v638 = vsel %vm191, %v632, 0
    %v641 = vsel %vm191, %v635, 0
    %643 = vmatpush.msra.mxu0 0.0
    %644 = vmatpush.msra.mxu0 0.0
    %645 = vmatpush.msra.mxu0 0.0
    %646 = vmatpush.msra.mxu0 0.0
    %647 = vmatpush.msra.mxu0 0.0
    %648 = vmatpush.msra.mxu0 0.0
    %649 = vmatpush.msra.mxu0 0.0
    %650 = vmatpush.msra.mxu0 0.0
    %651 = vmatpush.msra.mxu0 0.0
    %652 = vmatpush.msra.mxu0 0.0
    %653 = vmatpush.msra.mxu0 0.0
    %654 = vmatpush.msra.mxu0 0.0
    %655 = vmatpush.msra.mxu0 0.0
    %656 = vmatpush.msra.mxu0 0.0
    %657 = vmatpush.msra.mxu0 0.0
    %658 = vmatpush.msra.mxu0 %v183
    %659 = vmatmul.f32.gmra.mxu0 %v638
    %v660 = vpop.f32.mrf.mxu0
    %v661 = vadd.f32 0.0, %v660
    %662 = vmatmul.f32.gmra.mxu0 %v641
    %v663 = vpop.f32.mrf.mxu0
    %v664 = vadd.f32 0.0, %v663
    %665 = vdwg.mxu0
    %v666 = vadd.f32 %v500, %v661
    %v667 = vadd.f32 %v503, %v664
    %668 = vrot.lane.b32.xlu0 %v176, 104
    %v669 = vpop.permute.xlu0 %668
    %670 = vrot.lane.b32.xlu0 %v179, 104
    %v671 = vpop.permute.xlu0 %670
    %672 = vrot.lane.b32.xlu0 %v176, 72
    %v673 = vpop.permute.xlu0 %672
    %674 = vrot.lane.b32.xlu0 %v179, 72
    %v675 = vpop.permute.xlu0 %674
    %v676 = vsel %vm191, %v669, 0
    %v678 = vsel %vm191, %v671, 0
    %v680 = vsel %vm191, %v673, 0
    %v682 = vsel %vm191, %v675, 0
    %684 = vmatpush.xpose.msra.mxu0 0.0
    %685 = vmatpush.xpose.msra.mxu0 0.0
    %686 = vmatpush.xpose.msra.mxu0 0.0
    %687 = vmatpush.xpose.msra.mxu0 0.0
    %688 = vmatpush.xpose.msra.mxu0 0.0
    %689 = vmatpush.xpose.msra.mxu0 0.0
    %690 = vmatpush.xpose.msra.mxu0 0.0
    %691 = vmatpush.xpose.msra.mxu0 0.0
    %692 = vmatpush.xpose.msra.mxu0 0.0
    %693 = vmatpush.xpose.msra.mxu0 0.0
    %694 = vmatpush.xpose.msra.mxu0 0.0
    %695 = vmatpush.xpose.msra.mxu0 0.0
    %696 = vmatpush.xpose.msra.mxu0 0.0
    %697 = vmatpush.xpose.msra.mxu0 0.0
    %698 = vmatpush.xpose.msra.mxu0 %v682
    %699 = vmatpush.xpose.msra.mxu0 %v680
    %700 = vmatmul.f32.gmra.mxu0 %v676
    %v701 = vpop.f32.mrf.mxu0
    %v702 = vadd.f32 0.0, %v701
    %703 = vmatmul.f32.gmra.mxu0 %v678
    %v704 = vpop.f32.mrf.mxu0
    %v705 = vadd.f32 0.0, %v704
    %706 = vdwg.mxu0
    %v707 = vmul.f32 %v702, 0.35355338
    %v708 = vmul.f32 %v705, 0.35355338
    %s709 = scalar_lea.vmem [#allocation8], 48
    %v710 = vld [vmem:[%s709] sm:$0xff]
    %v711 = vld [vmem:[%s709 + $0x8] sm:$0xff]
    %v712 = vadd.f32 %v707, %v710
    %v713 = vadd.f32 %v708, %v711
    %v714 = vsel %vm229, %v712, -inf
    %715 = vmax.xlane.f32.xlu0 %v714
    %v716 = vpop.xlane.xlu0 %715
    %v717 = vsel %vm229, %v713, -inf
    %718 = vmax.xlane.f32.xlu0 %v717
    %v719 = vpop.xlane.xlu0 %718
    %v720 = vsub.f32 %v712, %v716
    %v721 = vsub.f32 %v713, %v719
    %v722 = vmul.f32 %v720, 1.442695
    %v723 = vpow.pop %v722
    %v724 = vmul.f32 %v721, 1.442695
    %v725 = vpow.pop %v724
    %v726 = vsel %vm229, %v723, 0.0
    %727 = vadd.xlane.f32.xlu0 %v726
    %v728 = vpop.xlane.xlu0 %727
    %v729 = vsel %vm229, %v725, 0.0
    %730 = vadd.xlane.f32.xlu0 %v729
    %v731 = vpop.xlane.xlu0 %730
    %v732 = vrcp.pop %v728
    %v733 = vmul.f32 %v728, %v732
    %v734 = vsub.f32 1.0, %v733
    %v735 = vmul.f32 %v732, %v734
    %v736 = vadd.f32 %v732, %v735
    %vm737 = vweird.f32 %v728
    %vm738 = vweird.f32 %v732
    %vm739 = vmor %vm737, %vm738
    %v740 = vsel %vm739, %v732, %v736
    %v741 = vand.u32 2147483647, %v728
    %vm742 = vcmp.eq.f32.partialorder %v741, 8.507059e+37
    %v743 = vand.u32 %v728, 2147483648
    %v744 = vor.u32 1.1754944e-38, %v743
    %v745 = vsel %vm742, %v744, %v740
    %v746 = vrcp.pop %v731
    %v747 = vmul.f32 %v731, %v746
    %v748 = vsub.f32 1.0, %v747
    %v749 = vmul.f32 %v746, %v748
    %v750 = vadd.f32 %v746, %v749
    %vm751 = vweird.f32 %v731
    %vm752 = vweird.f32 %v746
    %vm753 = vmor %vm751, %vm752
    %v754 = vsel %vm753, %v746, %v750
    %v755 = vand.u32 2147483647, %v731
    %vm756 = vcmp.eq.f32.partialorder %v755, 8.507059e+37
    %v757 = vand.u32 %v731, 2147483648
    %v758 = vor.u32 1.1754944e-38, %v757
    %v759 = vsel %vm756, %v758, %v754
    %v760 = vmul.f32 %v723, %v745
    %v761 = vmul.f32 %v725, %v759
    %s762 = scalar_lea.vmem %s5, 48
    %763 = vst.msk [vmem:[%s762] sm:$0xff] %vm229, %v760
    %764 = vst.msk [vmem:[%s762 + $0x8] sm:$0xff] %vm229, %v761
    %765 = vrot.lane.b32.xlu0 %v176, 40
    %v766 = vpop.permute.xlu0 %765
    %767 = vrot.lane.b32.xlu0 %v179, 40
    %v768 = vpop.permute.xlu0 %767
    %v772 = vsel %vm229, %v760, 0
    %v775 = vsel %vm229, %v761, 0
    %777 = vmatpush.msra.mxu0 0.0
    %778 = vmatpush.msra.mxu0 0.0
    %779 = vmatpush.msra.mxu0 0.0
    %780 = vmatpush.msra.mxu0 0.0
    %781 = vmatpush.msra.mxu0 0.0
    %782 = vmatpush.msra.mxu0 0.0
    %783 = vmatpush.msra.mxu0 0.0
    %784 = vmatpush.msra.mxu0 0.0
    %785 = vmatpush.msra.mxu0 0.0
    %786 = vmatpush.msra.mxu0 0.0
    %787 = vmatpush.msra.mxu0 0.0
    %788 = vmatpush.msra.mxu0 0.0
    %789 = vmatpush.msra.mxu0 0.0
    %790 = vmatpush.msra.mxu0 0.0
    %791 = vmatpush.msra.mxu0 %v768
    %792 = vmatpush.msra.mxu0 %v766
    %793 = vmatmul.f32.gmra.mxu0 %v772
    %v794 = vpop.f32.mrf.mxu0
    %v795 = vadd.f32 0.0, %v794
    %796 = vmatmul.f32.gmra.mxu0 %v775
    %v797 = vpop.f32.mrf.mxu0
    %v798 = vadd.f32 0.0, %v797
    %799 = vdwg.mxu0
    %v801 = vsel %vm191, %v795, 0
    %v804 = vsel %vm191, %v798, 0
    %806 = vmatpush.msra.mxu0 0.0
    %807 = vmatpush.msra.mxu0 0.0
    %808 = vmatpush.msra.mxu0 0.0
    %809 = vmatpush.msra.mxu0 0.0
    %810 = vmatpush.msra.mxu0 0.0
    %811 = vmatpush.msra.mxu0 0.0
    %812 = vmatpush.msra.mxu0 0.0
    %813 = vmatpush.msra.mxu0 0.0
    %814 = vmatpush.msra.mxu0 0.0
    %815 = vmatpush.msra.mxu0 0.0
    %816 = vmatpush.msra.mxu0 0.0
    %817 = vmatpush.msra.mxu0 0.0
    %818 = vmatpush.msra.mxu0 0.0
    %819 = vmatpush.msra.mxu0 0.0
    %820 = vmatpush.msra.mxu0 0.0
    %821 = vmatpush.msra.mxu0 %v184
    %822 = vmatmul.f32.gmra.mxu0 %v801
    %v823 = vpop.f32.mrf.mxu0
    %v824 = vadd.f32 0.0, %v823
    %825 = vmatmul.f32.gmra.mxu0 %v804
    %v826 = vpop.f32.mrf.mxu0
    %v827 = vadd.f32 0.0, %v826
    %828 = vdwg.mxu0
    %v829 = vadd.f32 %v666, %v824
    %v830 = vadd.f32 %v667, %v827
    %v831 = vperm.slane %v83, 0
    %v832 = vadd.f32 %v829, %v831
    %v833 = vadd.f32 %v830, %v831
    %v834 = vadd.f32 %v81, %v832
    %v835 = vadd.f32 %v82, %v833
    %v836 = vsel %vm90, %v834, 0.0
    %837 = vadd.xlane.f32.xlu0 %v836
    %v838 = vpop.xlane.xlu0 %837
    %v839 = vsel %vm90, %v835, 0.0
    %840 = vadd.xlane.f32.xlu0 %v839
    %v841 = vpop.xlane.xlu0 %840
    %v842 = vmul.f32 %v838, %v103
    %v843 = vmul.f32 %v841, %v103
    %v844 = vsub.f32 %v834, %v842
    %v845 = vsub.f32 %v835, %v843
    %v846 = vmul.f32 %v844, %v844
    %v847 = vmul.f32 %v845, %v845
    %v848 = vsel %vm90, %v846, 0.0
    %849 = vadd.xlane.f32.xlu0 %v848
    %v850 = vpop.xlane.xlu0 %849
    %v851 = vsel %vm90, %v847, 0.0
    %852 = vadd.xlane.f32.xlu0 %v851
    %v853 = vpop.xlane.xlu0 %852
    %v854 = vmul.f32 %v850, %v103
    %v855 = vmul.f32 %v853, %v103
    %v856 = vadd.f32 %v854, 1e-05
    %v857 = vadd.f32 %v855, 1e-05
    %v858 = vrsqrt.pop %v856
    %v859 = vmul.f32 %v858, %v856
    %v860 = vmul.f32 %v859, %v858
    %v861 = vmul.f32 0.5, %v860
    %v862 = vsub.f32 1.5, %v861
    %v863 = vmul.f32 %v858, %v862
    %vm864 = vweird.f32 %v856
    %vm865 = vweird.f32 %v858
    %vm866 = vmor %vm864, %vm865
    %v867 = vsel %vm866, %v858, %v863
    %v868 = vrsqrt.pop %v857
    %v869 = vmul.f32 %v868, %v857
    %v870 = vmul.f32 %v869, %v868
    %v871 = vmul.f32 0.5, %v870
    %v872 = vsub.f32 1.5, %v871
    %v873 = vmul.f32 %v868, %v872
    %vm874 = vweird.f32 %v857
    %vm875 = vweird.f32 %v868
    %vm876 = vmor %vm874, %vm875
    %v877 = vsel %vm876, %v868, %v873
    %v878 = vmul.f32 %v844, %v867
    %v879 = vmul.f32 %v845, %v877
    %v880 = vperm.slane %v86, 0
    %v881 = vmul.f32 %v878, %v880
    %v882 = vmul.f32 %v879, %v880
    %v883 = vperm.slane %v87, 0
    %v884 = vadd.f32 %v881, %v883
    %v885 = vadd.f32 %v882, %v883
    %v886 = vld [vmem:[#allocation5 + $0x10] sm:$0xff]
    %v887 = vld [vmem:[#allocation5 + $0x30] sm:$0xff]
    %v888 = vld [vmem:[#allocation5 + $0x50] sm:$0xff]
    %v889 = vld [vmem:[#allocation5 + $0x70] sm:$0xff]
    %v890 = vperm.slane %v88, 0
    %v892 = vsel %vm90, %v884, 0
    %v895 = vsel %vm90, %v885, 0
    %897 = vmatpush.msra.mxu0 0.0
    %898 = vmatpush.msra.mxu0 0.0
    %899 = vmatpush.msra.mxu0 0.0
    %900 = vmatpush.msra.mxu0 0.0
    %901 = vmatpush.msra.mxu0 0.0
    %902 = vmatpush.msra.mxu0 0.0
    %903 = vmatpush.msra.mxu0 0.0
    %904 = vmatpush.msra.mxu0 0.0
    %905 = vmatpush.msra.mxu0 0.0
    %906 = vmatpush.msra.mxu0 0.0
    %907 = vmatpush.msra.mxu0 0.0
    %908 = vmatpush.msra.mxu0 0.0
    %909 = vmatpush.msra.mxu0 %v889
    %910 = vmatpush.msra.mxu0 %v888
    %911 = vmatpush.msra.mxu0 %v887
    %912 = vmatpush.msra.mxu0 %v886
    %913 = vmatmul.f32.gmra.mxu0 %v892
    %v914 = vpop.f32.mrf.mxu0
    %v915 = vadd.f32 %v890, %v914
    %916 = vmatmul.f32.gmra.mxu0 %v895
    %v917 = vpop.f32.mrf.mxu0
    %v918 = vadd.f32 %v890, %v917
    %919 = vdwg.mxu0
    %v920 = vmax.f32 %v915, 0.0
    %v921 = vmax.f32 %v918, 0.0
    %v922 = vld [vmem:[#allocation5 + $0x18] sm:$0xff]
    %v923 = vld [vmem:[#allocation5 + $0x38] sm:$0xff]
    %v924 = vld [vmem:[#allocation5 + $0x58] sm:$0xff]
    %v925 = vld [vmem:[#allocation5 + $0x78] sm:$0xff]
    %v926 = vperm.slane %v89, 0
    %927 = vmatpush.xpose.msra.mxu0 0.0
    %928 = vmatpush.xpose.msra.mxu0 0.0
    %929 = vmatpush.xpose.msra.mxu0 0.0
    %930 = vmatpush.xpose.msra.mxu0 0.0
    %931 = vmatpush.xpose.msra.mxu0 0.0
    %932 = vmatpush.xpose.msra.mxu0 0.0
    %933 = vmatpush.xpose.msra.mxu0 0.0
    %934 = vmatpush.xpose.msra.mxu0 0.0
    %935 = vmatpush.xpose.msra.mxu0 0.0
    %936 = vmatpush.xpose.msra.mxu0 0.0
    %937 = vmatpush.xpose.msra.mxu0 0.0
    %938 = vmatpush.xpose.msra.mxu0 0.0
    %939 = vmatpush.xpose.msra.mxu0 %v925
    %940 = vmatpush.xpose.msra.mxu0 %v924
    %941 = vmatpush.xpose.msra.mxu0 %v923
    %942 = vmatpush.xpose.msra.mxu0 %v922
    %943 = vmatmul.f32.gmra.mxu0 %v920
    %v944 = vpop.f32.mrf.mxu0
    %v945 = vadd.f32 %v926, %v944
    %946 = vmatmul.f32.gmra.mxu0 %v921
    %v947 = vpop.f32.mrf.mxu0
    %v948 = vadd.f32 %v926, %v947
    %949 = vdwg.mxu0
    %v950 = vadd.f32 %v834, %v945
    %v951 = vadd.f32 %v835, %v948
    %952 = vst.msk [vmem:[#allocation10] sm:$0xff] %vm90, %v950
    %953 = vst.msk [vmem:[#allocation10 + $0x8] sm:$0xff] %vm90, %v951
    // Predicated region
    $region34: #{block_forward.1} parent=1 // pred_check
      _
    $region35: #{block_forward.1} parent=1 // pred_check_branch
      %955 = sbr.rel (0) target = $region37
    $region36: #{block_forward.1} parent=1 // pred_region
      %957 = vsyncadd [#allocation4], 0
      %s958 = sshll.u32 [#allocation10], 4
      %s959 = int_to_ptr.vmem [resolvable:$true] %s958
      %s960 = sshll.u32 %s4, 4
      %s961 = int_to_ptr.hbm [resolvable:$true] %s960
      %966 = dma.vmem_to_hbm [thread:$0]  %s959, 256, %s961, [#allocation4], 128, 128, 8
    $region37: #{block_forward.1} parent=1 // pred_fallthru
      _
    // Predicated region
    $region38: #{block_forward.1} parent=1 // pred_check
      _
    $region39: #{block_forward.1} parent=1 // pred_check_branch
      %968 = sbr.rel (0) target = $region41
    $region40: #{block_forward.1} parent=1 // pred_region
      _
    $region41: #{block_forward.1} parent=1 // pred_fallthru
      _
    // Predicated region
    $region42: #{block_forward.1} parent=1 // pred_check
      _
    $region43: #{block_forward.1} parent=1 // pred_check_branch
      %970 = sbr.rel (0) target = $region45
    $region44: #{block_forward.1} parent=1 // pred_region
      %972 = dma.done [#allocation4], 256
    $region45: #{block_forward.1} parent=1 // pred_fallthru
      _
    // Predicated region
    $region46: #{block_forward.1} parent=1 // pred_check
      _
    $region47: #{block_forward.1} parent=1 // pred_check_branch
      %974 = sbr.rel (0) target = $region49
    $region48: #{block_forward.1} parent=1 // pred_region
      _
    $region49: #{block_forward.1} parent=1 // pred_fallthru
      _
    %975 = vsyncpa [#allocation3], 1
    %976 = vsyncpa [#allocation6], 1
    %977 = vsyncpa [#allocation9], 1
    %978 = vsyncpa [#allocation4], 1

</llo_original>
